<compile_context>
chip_gen: v7x
topology: tpu7x:2x2x1
jax: 0.10.0
libtpu: 0.0.40
codegen_flags: <defaults>
</compile_context>

<pallas_src>
import functools

import jax
import jax.numpy as jnp
from jax.experimental import pallas as pl
from jax.experimental.pallas import tpu as pltpu


def _gcn_fused_kernel(x_ref, a_ref, w_ref, b_ref, src_ref, out_ref, hw_ref, *, tm):
    """Grid = (layer, dst_row_block).

    x_ref   : (Np, Fp)       f32   input features (read at layer 0 only, resident)
    a_ref   : (1, TM, Np)    int8  adjacency row block of this layer, A[d, s]
    w_ref   : (1, Fp, Fp)    bf16  padded weight of this layer
    b_ref   : (1, 1, Fp)     f32   padded bias of this layer
    src_ref : (1, Np, 1)     f32   per-source norm  1/sqrt(max(out_deg, 1))
    out_ref : (Np, Fp)       f32   resident running features / final output
    hw_ref  : (Np, Fp)       bf16  scratch: (h @ W) * src_norm for this layer
    """
    layer = pl.program_id(0)
    m = pl.program_id(1)
    is_last = layer == pl.num_programs(0) - 1

    # ---- once per layer (first row block): hw_n = (h @ W) * src_norm ----
    @pl.when(m == 0)
    def _():
        w = w_ref[0]            # (Fp, Fp) bf16
        src = src_ref[0]        # (Np, 1)  f32

        @pl.when(layer == 0)
        def _():
            hw = jnp.dot(x_ref[...].astype(jnp.bfloat16), w,
                         preferred_element_type=jnp.float32)      # (Np, Fp) f32
            hw_ref[...] = (hw * src).astype(jnp.bfloat16)

        @pl.when(layer != 0)
        def _():
            hw = jnp.dot(out_ref[...].astype(jnp.bfloat16), w,
                         preferred_element_type=jnp.float32)      # (Np, Fp) f32
            hw_ref[...] = (hw * src).astype(jnp.bfloat16)

    # ---- every row block: aggregate over sources for TM destination rows ----
    a_blk = a_ref[0].astype(jnp.bfloat16)                         # (TM, Np) 0/1 exact
    in_deg = jnp.sum(a_blk, axis=1, dtype=jnp.float32, keepdims=True)   # (TM, 1)
    dst_norm = jax.lax.rsqrt(jnp.maximum(in_deg, 1.0))            # (TM, 1)

    agg = jnp.dot(a_blk, hw_ref[...],
                  preferred_element_type=jnp.float32)             # (TM, Fp) f32
    out_blk = agg * dst_norm + b_ref[0]                           # (TM, Fp)

    rows = pl.ds(pl.multiple_of(m * tm, tm), tm)

    # Last layer: no activation, leave the raw result in the resident output.
    @pl.when(is_last)
    def _():
        out_ref[rows, :] = out_blk

    # Hidden layers: ReLU, the resident output doubles as next layer's h.
    @pl.when(jnp.logical_not(is_last))
    def _():
        out_ref[rows, :] = jnp.maximum(out_blk, 0.0)


def _round_up(v, m):
    return (v + m - 1) // m * m


def gcn_forward(blocks, x, params):
    """blocks: list of (N, N) dense 0/1 adjacency (a[d, s] = 1 iff edge s->d);
    x: (N, in_feats) f32; params: list of (W, b), W (F_in, F_out), b (1, F_out).
    (Assumes a constant node set across blocks, as in the previous version.)"""
    n_layers = len(params)
    assert len(blocks) == n_layers
    n = x.shape[0]
    dims = [x.shape[1]] + [w.shape[1] for (w, _) in params]
    n_classes = dims[-1]

    # Lane-dense padding: feature dims / node count to multiples of 128.
    f_pad = _round_up(max(dims), 128)
    n_pad = _round_up(n, 128)
    tm = 256 if n_pad % 256 == 0 else 128       # dst-row tile
    n_row_blocks = n_pad // tm

    # Per-layer operand stacks (zero padding keeps padded rows/cols inert:
    # padded adjacency columns are 0, so padded nodes never reach real nodes).
    a_stack = jnp.zeros((n_layers, n_pad, n_pad), jnp.int8)
    w_stack = jnp.zeros((n_layers, f_pad, f_pad), jnp.bfloat16)
    b_stack = jnp.zeros((n_layers, 1, f_pad), jnp.float32)
    src_stack = jnp.ones((n_layers, n_pad, 1), jnp.float32)
    for i, (a, (w, b)) in enumerate(zip(blocks, params)):
        a = a.astype(jnp.float32)
        a_stack = a_stack.at[i, :n, :n].set(a.astype(jnp.int8))
        w_stack = w_stack.at[i, :w.shape[0], :w.shape[1]].set(w.astype(jnp.bfloat16))
        b_stack = b_stack.at[i, :, :b.shape[1]].set(b)
        out_deg = jnp.maximum(jnp.sum(a, axis=0), 1.0)            # per-source degree
        src_stack = src_stack.at[i, :n, 0].set(jax.lax.rsqrt(out_deg))
    x_pad = jnp.zeros((n_pad, f_pad), jnp.float32).at[:n, :x.shape[1]].set(x)

    # Explicit VMEM budget (resident blocks + double-buffered streams + temps).
    vmem_bytes = (
        n_pad * f_pad * 4            # resident x block (f32)
        + n_pad * f_pad * 4          # resident out/h block (f32)
        + n_pad * f_pad * 2          # hw scratch (bf16)
        + 2 * tm * n_pad * 1         # A row block, int8, double buffered
        + 2 * f_pad * f_pad * 2      # W, bf16, double buffered
        + 2 * f_pad * 4              # bias, double buffered
        + 2 * n_pad * 512            # src_norm (lane-sparse VMEM layout), x2
        + tm * n_pad * 2             # in-kernel bf16 A temp
        + n_pad * f_pad * 2          # in-kernel bf16 h temp (m == 0)
        + 2 * tm * f_pad * 4         # agg / out_blk temporaries
    )
    vmem_limit = int(min(max(2 * vmem_bytes + (4 << 20), 32 << 20), 96 << 20))

    kernel = functools.partial(_gcn_fused_kernel, tm=tm)

    out = pl.pallas_call(
        kernel,
        out_shape=jax.ShapeDtypeStruct((n_pad, f_pad), jnp.float32),
        grid_spec=pltpu.PrefetchScalarGridSpec(
            num_scalar_prefetch=0,
            grid=(n_layers, n_row_blocks),
            in_specs=[
                pl.BlockSpec((n_pad, f_pad), lambda l, m: (0, 0)),         # x (resident)
                pl.BlockSpec((1, tm, n_pad), lambda l, m: (l, m, 0)),      # A row block
                pl.BlockSpec((1, f_pad, f_pad), lambda l, m: (l, 0, 0)),   # W per layer
                pl.BlockSpec((1, 1, f_pad), lambda l, m: (l, 0, 0)),       # b per layer
                pl.BlockSpec((1, n_pad, 1), lambda l, m: (l, 0, 0)),       # src norm
            ],
            out_specs=pl.BlockSpec((n_pad, f_pad), lambda l, m: (0, 0)),   # resident h/out
            scratch_shapes=[pltpu.VMEM((n_pad, f_pad), jnp.bfloat16)],     # hw_n
        ),
        compiler_params=pltpu.CompilerParams(
            dimension_semantics=("arbitrary", "arbitrary"),
            vmem_limit_bytes=vmem_limit,
        ),
    )(x_pad, a_stack, w_stack, b_stack, src_stack)

    return out[:n, :n_classes]


def gcn_reference(blocks, x, params):
    """Pure-JAX f32 reference of the same GraphConv stack (for a sanity check)."""
    h = x
    n_layers = len(params)
    for i, (a, (w, b)) in enumerate(zip(blocks, params)):
        a = a.astype(jnp.float32)
        src_norm = jax.lax.rsqrt(jnp.maximum(jnp.sum(a, axis=0), 1.0))[:, None]
        dst_norm = jax.lax.rsqrt(jnp.maximum(jnp.sum(a, axis=1), 1.0))[:, None]
        h = a @ ((h * src_norm) @ w) * dst_norm + b
        if i != n_layers - 1:
            h = jnp.maximum(h, 0.0)
    return h


def xavier_uniform(key, fan_in, fan_out):
    limit = jnp.sqrt(6.0 / (fan_in + fan_out))
    return jax.random.uniform(key, (fan_in, fan_out), jnp.float32,
                              minval=-limit, maxval=limit)


def make_gcn_params(key, in_feats, n_hidden, n_classes, n_layers):
    dims = [in_feats] + [n_hidden] * (n_layers - 1) + [n_classes]
    params = []
    for li in range(n_layers):
        key, wkey = jax.random.split(key)
        w = xavier_uniform(wkey, dims[li], dims[li + 1])
        b = jnp.zeros((1, dims[li + 1]), jnp.float32)  # GraphConv bias init = zeros
        params.append((w, b))
    return params


if __name__ == "__main__":
    key = jax.random.PRNGKey(0)

    N = 128          # nodes (kept constant across blocks for simplicity)
    in_feats = 64
    n_hidden = 32
    n_classes = 8
    n_layers = 3

    key, xkey, pkey, *akeys = jax.random.split(key, 3 + n_layers)

    # Deterministic synthetic inputs.
    x = jax.random.normal(xkey, (N, in_feats), jnp.float32)
    blocks = [
        (jax.random.uniform(akeys[i], (N, N)) < 0.05).astype(jnp.float32)
        for i in range(n_layers)
    ]
    params = make_gcn_params(pkey, in_feats, n_hidden, n_classes, n_layers)

    out = gcn_forward(blocks, x, params)
    out = jax.block_until_ready(out)

    assert out.shape == (N, n_classes), out.shape
    assert out.dtype == jnp.float32
    assert bool(jnp.all(jnp.isfinite(out)))

    # Generous tolerance: kernel uses bf16 MXU operands (f32 accumulation) vs f32 ref.
    ref = gcn_reference(blocks, x, params)
    max_err = float(jnp.max(jnp.abs(out - ref)))
    assert max_err < 0.2, f"max abs error vs reference: {max_err}"

    print("KERNEL_OK")
</pallas_src>

<mosaic_0001>
module attributes {stable_mosaic.version = 11 : i64} {
  func.func @_gcn_fused_kernel(%arg0: i32, %arg1: i32, %arg2: memref<128x128xf32, #tpu.memory_space<vmem>>, %arg3: memref<1x128x128xi8, #tpu.memory_space<vmem>>, %arg4: memref<1x128x128xbf16, #tpu.memory_space<vmem>>, %arg5: memref<1x1x128xf32, #tpu.memory_space<vmem>>, %arg6: memref<1x128x1xf32, #tpu.memory_space<vmem>>, %arg7: memref<128x128xf32, #tpu.memory_space<vmem>>, %arg8: memref<128x128xbf16, #tpu.memory_space<vmem>>) attributes {dimension_semantics = [#tpu.dimension_semantics<arbitrary>, #tpu.dimension_semantics<arbitrary>], iteration_bounds = array<i64: 3, 1>, scalar_prefetch = 0 : i64, scratch_operands = 1 : i64, tpu.core_type = #tpu.core_type<tc>, window_params = [{pipeline_mode = #tpu.pipeline_mode<synchronous>, transform_indices = @transform_0, window_bounds = array<i64: 128, 128>}, {transform_indices = @transform_1, window_bounds = array<i64: 1, 128, 128>}, {transform_indices = @transform_2, window_bounds = array<i64: 1, 128, 128>}, {transform_indices = @transform_3, window_bounds = array<i64: 1, 1, 128>}, {transform_indices = @transform_4, window_bounds = array<i64: 1, 128, 1>}, {pipeline_mode = #tpu.pipeline_mode<synchronous>, transform_indices = @transform_5, window_bounds = array<i64: 128, 128>}]} {
    %c2_i32 = arith.constant 2 : i32
    %0 = arith.cmpi eq, %arg0, %c2_i32 : i32
    %c0_i32 = arith.constant 0 : i32
    %1 = arith.cmpi eq, %arg1, %c0_i32 : i32
    %2 = arith.extui %1 : i1 to i32
    %c0_i32_0 = arith.constant 0 : i32
    %3 = arith.cmpi ne, %2, %c0_i32_0 : i32
    scf.if %3 {
      %c0_12 = arith.constant 0 : index
      %c0_13 = arith.constant 0 : index
      %c0_14 = arith.constant 0 : index
      %28 = vector.load %arg4[%c0_12, %c0_13, %c0_14] : memref<1x128x128xbf16, #tpu.memory_space<vmem>>, vector<1x128x128xbf16>
      %29 = vector.shape_cast %28 : vector<1x128x128xbf16> to vector<128x128xbf16>
      %c0_15 = arith.constant 0 : index
      %c0_16 = arith.constant 0 : index
      %c0_17 = arith.constant 0 : index
      %30 = vector.load %arg6[%c0_15, %c0_16, %c0_17] : memref<1x128x1xf32, #tpu.memory_space<vmem>>, vector<1x128x1xf32>
      %31 = vector.shape_cast %30 : vector<1x128x1xf32> to vector<128x1xf32>
      %c0_i32_18 = arith.constant 0 : i32
      %32 = arith.cmpi eq, %arg0, %c0_i32_18 : i32
      %33 = arith.extui %32 : i1 to i32
      %c0_i32_19 = arith.constant 0 : i32
      %34 = arith.cmpi ne, %33, %c0_i32_19 : i32
      scf.if %34 {
        %c0_22 = arith.constant 0 : index
        %c0_23 = arith.constant 0 : index
        %38 = vector.load %arg2[%c0_22, %c0_23] : memref<128x128xf32, #tpu.memory_space<vmem>>, vector<128x128xf32>
        %39 = arith.truncf %38 : vector<128x128xf32> to vector<128x128xbf16>
        %cst_24 = arith.constant dense<0.000000e+00> : vector<128x128xf32>
        %40 = tpu.matmul %39, %29, %cst_24 {dimension_numbers = #tpu.dot_dimension_numbers<[1], [0], [0], [1], [0, 0, 1, 1], [], []>} : vector<128x128xbf16>, vector<128x128xbf16>, vector<128x128xf32> -> vector<128x128xf32>
        %41 = vector.broadcast %31 : vector<128x1xf32> to vector<128x128xf32>
        %42 = arith.mulf %40, %41 : vector<128x128xf32>
        %43 = arith.truncf %42 : vector<128x128xf32> to vector<128x128xbf16>
        %c0_25 = arith.constant 0 : index
        %c0_26 = arith.constant 0 : index
        %44 = vector.load %arg8[%c0_25, %c0_26] : memref<128x128xbf16, #tpu.memory_space<vmem>>, vector<128x128xbf16>
        tpu.vector_store %arg8[%c0_25, %c0_26], %43 {strides = array<i32>} : memref<128x128xbf16, #tpu.memory_space<vmem>>, vector<128x128xbf16>,
      } else {
      }
      %c0_i32_20 = arith.constant 0 : i32
      %35 = arith.cmpi ne, %arg0, %c0_i32_20 : i32
      %36 = arith.extui %35 : i1 to i32
      %c0_i32_21 = arith.constant 0 : i32
      %37 = arith.cmpi ne, %36, %c0_i32_21 : i32
      scf.if %37 {
        %c0_22 = arith.constant 0 : index
        %c0_23 = arith.constant 0 : index
        %38 = vector.load %arg7[%c0_22, %c0_23] : memref<128x128xf32, #tpu.memory_space<vmem>>, vector<128x128xf32>
        %39 = arith.truncf %38 : vector<128x128xf32> to vector<128x128xbf16>
        %cst_24 = arith.constant dense<0.000000e+00> : vector<128x128xf32>
        %40 = tpu.matmul %39, %29, %cst_24 {dimension_numbers = #tpu.dot_dimension_numbers<[1], [0], [0], [1], [0, 0, 1, 1], [], []>} : vector<128x128xbf16>, vector<128x128xbf16>, vector<128x128xf32> -> vector<128x128xf32>
        %41 = vector.broadcast %31 : vector<128x1xf32> to vector<128x128xf32>
        %42 = arith.mulf %40, %41 : vector<128x128xf32>
        %43 = arith.truncf %42 : vector<128x128xf32> to vector<128x128xbf16>
        %c0_25 = arith.constant 0 : index
        %c0_26 = arith.constant 0 : index
        %44 = vector.load %arg8[%c0_25, %c0_26] : memref<128x128xbf16, #tpu.memory_space<vmem>>, vector<128x128xbf16>
        tpu.vector_store %arg8[%c0_25, %c0_26], %43 {strides = array<i32>} : memref<128x128xbf16, #tpu.memory_space<vmem>>, vector<128x128xbf16>,
      } else {
      }
    } else {
    }
    %c0 = arith.constant 0 : index
    %c0_1 = arith.constant 0 : index
    %c0_2 = arith.constant 0 : index
    %4 = vector.load %arg3[%c0, %c0_1, %c0_2] : memref<1x128x128xi8, #tpu.memory_space<vmem>>, vector<1x128x128xi8>
    %5 = vector.shape_cast %4 : vector<1x128x128xi8> to vector<128x128xi8>
    %6 = arith.sitofp %5 : vector<128x128xi8> to vector<128x128xbf16>
    %7 = arith.extf %6 : vector<128x128xbf16> to vector<128x128xf32>
    %cst = arith.constant dense<0.000000e+00> : vector<128xf32>
    %8 = vector.multi_reduction <add>, %7, %cst [1] : vector<128x128xf32> to vector<128xf32>
    %9 = vector.shape_cast %8 : vector<128xf32> to vector<128x1xf32>
    %cst_3 = arith.constant 1.000000e+00 : f32
    %10 = vector.broadcast %cst_3 : f32 to vector<128x1xf32>
    %11 = arith.maximumf %9, %10 : vector<128x1xf32>
    %12 = math.rsqrt %11 : vector<128x1xf32>
    %c0_4 = arith.constant 0 : index
    %c0_5 = arith.constant 0 : index
    %13 = vector.load %arg8[%c0_4, %c0_5] : memref<128x128xbf16, #tpu.memory_space<vmem>>, vector<128x128xbf16>
    %cst_6 = arith.constant dense<0.000000e+00> : vector<128x128xf32>
    %14 = tpu.matmul %6, %13, %cst_6 {dimension_numbers = #tpu.dot_dimension_numbers<[1], [0], [0], [1], [0, 0, 1, 1], [], []>} : vector<128x128xbf16>, vector<128x128xbf16>, vector<128x128xf32> -> vector<128x128xf32>
    %15 = vector.broadcast %12 : vector<128x1xf32> to vector<128x128xf32>
    %16 = arith.mulf %14, %15 : vector<128x128xf32>
    %c0_7 = arith.constant 0 : index
    %c0_8 = arith.constant 0 : index
    %c0_9 = arith.constant 0 : index
    %17 = vector.load %arg5[%c0_7, %c0_8, %c0_9] : memref<1x1x128xf32, #tpu.memory_space<vmem>>, vector<1x1x128xf32>
    %18 = vector.shape_cast %17 : vector<1x1x128xf32> to vector<1x128xf32>
    %19 = vector.broadcast %18 : vector<1x128xf32> to vector<128x128xf32>
    %20 = arith.addf %16, %19 : vector<128x128xf32>
    %c128_i32 = arith.constant 128 : i32
    %21 = arith.muli %arg1, %c128_i32 : i32
    %22 = tpu.assume_multiple %21, 128 : i32
    %23 = arith.extui %0 : i1 to i32
    %c0_i32_10 = arith.constant 0 : i32
    %24 = arith.cmpi ne, %23, %c0_i32_10 : i32
    scf.if %24 {
      %28 = arith.index_cast %22 : i32 to index
      %c0_12 = arith.constant 0 : index
      %29 = vector.load %arg7[%28, %c0_12] : memref<128x128xf32, #tpu.memory_space<vmem>>, vector<128x128xf32>
      tpu.vector_store %arg7[%28, %c0_12], %20 {strides = array<i32>} : memref<128x128xf32, #tpu.memory_space<vmem>>, vector<128x128xf32>,
    } else {
    }
    %true = arith.constant true
    %25 = arith.xori %0, %true : i1
    %26 = arith.extui %25 : i1 to i32
    %c0_i32_11 = arith.constant 0 : i32
    %27 = arith.cmpi ne, %26, %c0_i32_11 : i32
    scf.if %27 {
      %cst_12 = arith.constant 0.000000e+00 : f32
      %28 = vector.broadcast %cst_12 : f32 to vector<128x128xf32>
      %29 = arith.maximumf %20, %28 : vector<128x128xf32>
      %30 = arith.index_cast %22 : i32 to index
      %c0_13 = arith.constant 0 : index
      %31 = vector.load %arg7[%30, %c0_13] : memref<128x128xf32, #tpu.memory_space<vmem>>, vector<128x128xf32>
      tpu.vector_store %arg7[%30, %c0_13], %29 {strides = array<i32>} : memref<128x128xf32, #tpu.memory_space<vmem>>, vector<128x128xf32>,
    } else {
    }
    return
  }
  func.func @transform_0(%arg0: i32, %arg1: i32) -> (i32, i32) {
    %c0_i32 = arith.constant 0 : i32
    %c0_i32_0 = arith.constant 0 : i32
    %c0_i32_1 = arith.constant 0 : i32
    return %c0_i32, %c0_i32_0 : i32, i32
  }
  func.func @transform_1(%arg0: i32, %arg1: i32) -> (i32, i32, i32) {
    %c0_i32 = arith.constant 0 : i32
    %c0_i32_0 = arith.constant 0 : i32
    return %arg0, %arg1, %c0_i32 : i32, i32, i32
  }
  func.func @transform_2(%arg0: i32, %arg1: i32) -> (i32, i32, i32) {
    %c0_i32 = arith.constant 0 : i32
    %c0_i32_0 = arith.constant 0 : i32
    %c0_i32_1 = arith.constant 0 : i32
    return %arg0, %c0_i32, %c0_i32_0 : i32, i32, i32
  }
  func.func @transform_3(%arg0: i32, %arg1: i32) -> (i32, i32, i32) {
    %c0_i32 = arith.constant 0 : i32
    %c0_i32_0 = arith.constant 0 : i32
    %c0_i32_1 = arith.constant 0 : i32
    return %arg0, %c0_i32, %c0_i32_0 : i32, i32, i32
  }
  func.func @transform_4(%arg0: i32, %arg1: i32) -> (i32, i32, i32) {
    %c0_i32 = arith.constant 0 : i32
    %c0_i32_0 = arith.constant 0 : i32
    %c0_i32_1 = arith.constant 0 : i32
    return %arg0, %c0_i32, %c0_i32_0 : i32, i32, i32
  }
  func.func @transform_5(%arg0: i32, %arg1: i32) -> (i32, i32) {
    %c0_i32 = arith.constant 0 : i32
    %c0_i32_0 = arith.constant 0 : i32
    %c0_i32_1 = arith.constant 0 : i32
    return %c0_i32, %c0_i32_0 : i32, i32
  }
}

</mosaic_0001>

<llo_original>
// kernel: tpu_custom_call.1
$region0: #{tpu_custom_call.1}
  #allocation0 [shape = 'u32[]', space=smem, size = 0x4, offset = 0x4, fixed_abs, tag = 'smem constant byte address 0x4 - core index']
  #allocation1 [shape = 'u32[144,128]{1,0:T(1,128)}', space=vmem, size = 0x12000, scoped, tag = 'internal scratch']
  #allocation2 [shape = 'bf16[128,128]{1,0:T(16,128)(2,1)}', space=vmem, size = 0x8000, scoped, tag = 'scratch operand']
  %s0 = inlined_call_operand.vmem [shape: f32[128,128], index: 0, kind: input, shape index: {}]
  %s1 = inlined_call_operand.hbm [shape: s8[3,128,128], index: 1, kind: input, shape index: {}]
  %s2 = inlined_call_operand.vmem [shape: bf16[3,128,128], index: 2, kind: input, shape index: {}]
  %s3 = inlined_call_operand.vmem [shape: f32[3,1,128], index: 3, kind: input, shape index: {}]
  %s4 = inlined_call_operand.vmem [shape: f32[3,128,1], index: 4, kind: input, shape index: {}]
  %s5 = inlined_call_operand.hbm [shape: f32[128,128], index: 5, kind: output, shape index: {}]
  %s6 = sld [smem:[#allocation0]]
  $region77: #{tpu_custom_call.1} parent=0
    _
  %s8 = ssub.s32 1, %s6
  %s9 = scalar_select 0, %s8, %s6
  $region1: #{tpu_custom_call.1} parent=0
    #allocation3 [shape = 'u8[32768]{0}', space=vmem, size = 0x8000, scoped, tag = 'input window, operand 1']
    #allocation4 [shape = 's32[2]{0}', space=sflag, size = 0x8, scoped, tag = 'scoped memory for tpu_custom_call.1']
    #allocation5 [shape = 's32[2]{0}', space=sflag, size = 0x8, scoped, tag = 'scoped memory for tpu_custom_call.1']
    #allocation6 [shape = 'u8[65536]{0}', space=vmem, size = 0x10000, scoped, tag = 'output window, operand 0, single buffered']
    %10 = vsyncpa [#allocation4], 0
    %s11 = scalar_lea.sflag [#allocation4], 1
    %12 = vsyncpa %s11, 0
    %13 = vsyncpa [#allocation5], 0
    loop: start=0, step=1, limit=5
    $region2: #{tpu_custom_call.1} parent=1 // loop_pre_header
      _
    $region3: #{tpu_custom_call.1} parent=1 // loop_header
      %s15 = sphi 0, %s19
      %p16 = scmp.ge.s32.totalorder %s15, 5
      %s22 = sphi 0, %s34
      %s23 = sphi 0, %s30
      %s24 = sphi 0, %s22
      %s25 = sphi 0, %s23
      %s26 = sphi 0, %s24
      %s27 = sphi 0, %s25
      %s35 = sphi 0, %s35
      %s37 = sphi 0, %s35
      %s38 = sphi 0, %s37
      %s52 = sphi 0, %s38
      %s60 = sphi 0, %s62
      %s63 = sphi 0, %s60
      %s64 = sphi 0, %s63
      %s80 = sphi 0, %s64
      %s86 = sphi 0, %s88
      %s89 = sphi 0, %s86
      %s90 = sphi 0, %s89
      %s106 = sphi 0, %s90
      %s112 = sphi 0, %s114
      %s115 = sphi 0, %s112
      %s116 = sphi 0, %s115
      %s132 = sphi 0, %s116
      %s138 = sphi 0, %s140
      %s141 = sphi 0, %s138
      %s142 = sphi 0, %s141
      %s158 = sphi 0, %s142
      %s162 = sphi 0, %s162
      %s164 = sphi 0, %s162
      %s165 = sphi 0, %s164
      %s179 = sphi 0, %s165
    $region4: #{tpu_custom_call.1} parent=1 // loop_header_branch
      %18 = sbr.rel (%p16) target = $region8
    $region5: #{tpu_custom_call.1} parent=1 // loop_body
      %s20 = ssub.s32 %s15, 1
      %s21 = ssub.s32 %s15, 2
      %s28 = sadd.s32 1, %s23
      %p29 = scmp.ge.s32.totalorder %s28, 1
      %s30 = scalar_select %p29, 0, %s28
      %s31 = sadd.s32 1, %s22
      %s32 = scalar_select %p29, %s31, %s22
      %p33 = scmp.ge.s32.totalorder %s32, 3
      %s34 = scalar_select %p33, 0, %s32
      %s36 = sadd.s32 %s35, 1
      %p39 = scmp.eq.s32.totalorder %s15, 2
      %p40 = scmp.ne.s32.totalorder %s35, %s37
      %p41 = scmp.eq.s32.totalorder %s15, 0
      %p42 = por %p40, %p41
      %p43 = scmp.ne.s32.totalorder %s35, %s37
      %p44 = scmp.eq.s32.totalorder %s20, 2
      %p45 = por %p43, %p44
      %p46 = scmp.ne.s32.totalorder %s37, %s38
      %p47 = scmp.eq.s32.totalorder %s20, 0
      %p48 = por %p46, %p47
      %p49 = scmp.ne.s32.totalorder %s37, %s38
      %p50 = scmp.eq.s32.totalorder %s21, 2
      %p51 = por %p49, %p50
      %p53 = scmp.ne.s32.totalorder %s38, %s52
      %p54 = scmp.eq.s32.totalorder %s21, 0
      %p55 = por %p53, %p54
      %s56 = ssub.s32 %s22, %s34
      %s57 = ssub.s32 %s23, %s30
      %s58 = sor.u32 %s56, %s57
      %p59 = scmp.eq.s32.totalorder %s58, 0
      %s61 = sadd.s32 %s60, 1
      %s62 = scalar_select %p59, %s60, %s61
      %p65 = pneg %p59
      %p66 = scmp.eq.s32.totalorder %s15, 2
      %p67 = por %p65, %p66
      %p68 = scmp.ne.s32.totalorder %s60, %s63
      %p69 = scmp.eq.s32.totalorder %s15, 0
      %p70 = por %p68, %p69
      %p71 = scmp.ne.s32.totalorder %s60, %s63
      %p72 = scmp.eq.s32.totalorder %s20, 2
      %p73 = por %p71, %p72
      %p74 = scmp.ne.s32.totalorder %s63, %s64
      %p75 = scmp.eq.s32.totalorder %s20, 0
      %p76 = por %p74, %p75
      %p77 = scmp.ne.s32.totalorder %s63, %s64
      %p78 = scmp.eq.s32.totalorder %s21, 2
      %p79 = por %p77, %p78
      %p81 = scmp.ne.s32.totalorder %s64, %s80
      %p82 = scmp.eq.s32.totalorder %s21, 0
      %p83 = por %p81, %p82
      %s84 = ssub.s32 %s22, %s34
      %p85 = scmp.eq.s32.totalorder %s84, 0
      %s87 = sadd.s32 %s86, 1
      %s88 = scalar_select %p85, %s86, %s87
      %p91 = pneg %p85
      %p92 = scmp.eq.s32.totalorder %s15, 2
      %p93 = por %p91, %p92
      %p94 = scmp.ne.s32.totalorder %s86, %s89
      %p95 = scmp.eq.s32.totalorder %s15, 0
      %p96 = por %p94, %p95
      %p97 = scmp.ne.s32.totalorder %s86, %s89
      %p98 = scmp.eq.s32.totalorder %s20, 2
      %p99 = por %p97, %p98
      %p100 = scmp.ne.s32.totalorder %s89, %s90
      %p101 = scmp.eq.s32.totalorder %s20, 0
      %p102 = por %p100, %p101
      %p103 = scmp.ne.s32.totalorder %s89, %s90
      %p104 = scmp.eq.s32.totalorder %s21, 2
      %p105 = por %p103, %p104
      %p107 = scmp.ne.s32.totalorder %s90, %s106
      %p108 = scmp.eq.s32.totalorder %s21, 0
      %p109 = por %p107, %p108
      %s110 = ssub.s32 %s22, %s34
      %p111 = scmp.eq.s32.totalorder %s110, 0
      %s113 = sadd.s32 %s112, 1
      %s114 = scalar_select %p111, %s112, %s113
      %p117 = pneg %p111
      %p118 = scmp.eq.s32.totalorder %s15, 2
      %p119 = por %p117, %p118
      %p120 = scmp.ne.s32.totalorder %s112, %s115
      %p121 = scmp.eq.s32.totalorder %s15, 0
      %p122 = por %p120, %p121
      %p123 = scmp.ne.s32.totalorder %s112, %s115
      %p124 = scmp.eq.s32.totalorder %s20, 2
      %p125 = por %p123, %p124
      %p126 = scmp.ne.s32.totalorder %s115, %s116
      %p127 = scmp.eq.s32.totalorder %s20, 0
      %p128 = por %p126, %p127
      %p129 = scmp.ne.s32.totalorder %s115, %s116
      %p130 = scmp.eq.s32.totalorder %s21, 2
      %p131 = por %p129, %p130
      %p133 = scmp.ne.s32.totalorder %s116, %s132
      %p134 = scmp.eq.s32.totalorder %s21, 0
      %p135 = por %p133, %p134
      %s136 = ssub.s32 %s22, %s34
      %p137 = scmp.eq.s32.totalorder %s136, 0
      %s139 = sadd.s32 %s138, 1
      %s140 = scalar_select %p137, %s138, %s139
      %p143 = pneg %p137
      %p144 = scmp.eq.s32.totalorder %s15, 2
      %p145 = por %p143, %p144
      %p146 = scmp.ne.s32.totalorder %s138, %s141
      %p147 = scmp.eq.s32.totalorder %s15, 0
      %p148 = por %p146, %p147
      %p149 = scmp.ne.s32.totalorder %s138, %s141
      %p150 = scmp.eq.s32.totalorder %s20, 2
      %p151 = por %p149, %p150
      %p152 = scmp.ne.s32.totalorder %s141, %s142
      %p153 = scmp.eq.s32.totalorder %s20, 0
      %p154 = por %p152, %p153
      %p155 = scmp.ne.s32.totalorder %s141, %s142
      %p156 = scmp.eq.s32.totalorder %s21, 2
      %p157 = por %p155, %p156
      %p159 = scmp.ne.s32.totalorder %s142, %s158
      %p160 = scmp.eq.s32.totalorder %s21, 0
      %p161 = por %p159, %p160
      %s163 = sadd.s32 %s162, 1
      %p166 = scmp.eq.s32.totalorder %s15, 2
      %p167 = scmp.ne.s32.totalorder %s162, %s164
      %p168 = scmp.eq.s32.totalorder %s15, 0
      %p169 = por %p167, %p168
      %p170 = scmp.ne.s32.totalorder %s162, %s164
      %p171 = scmp.eq.s32.totalorder %s20, 2
      %p172 = por %p170, %p171
      %p173 = scmp.ne.s32.totalorder %s164, %s165
      %p174 = scmp.eq.s32.totalorder %s20, 0
      %p175 = por %p173, %p174
      %p176 = scmp.ne.s32.totalorder %s164, %s165
      %p177 = scmp.eq.s32.totalorder %s21, 2
      %p178 = por %p176, %p177
      %p180 = scmp.ne.s32.totalorder %s165, %s179
      %p181 = scmp.eq.s32.totalorder %s21, 0
      %p182 = por %p180, %p181
      %p183 = scmp.le.s32.totalorder 1, %s15
      %p184 = scmp.lt.s32.totalorder %s15, 4
      %p185 = pnand %p183, %p184
      %p186 = pneg %p185
      // Predicated region
      $region9: #{tpu_custom_call.1} parent=5 // pred_check
        _
      $region10: #{tpu_custom_call.1} parent=5 // pred_check_branch
        %188 = sbr.rel (%p185) target = $region12
      $region11: #{tpu_custom_call.1} parent=5 // pred_region
        %s189 = ssub.s32 %s15, 1
        // Predicated region
        $region13: #{tpu_custom_call.1} parent=11 // pred_check
          %p190 = pneg %p48
        $region14: #{tpu_custom_call.1} parent=11 // pred_check_branch
          %192 = sbr.rel (%p190) target = $region16
        $region15: #{tpu_custom_call.1} parent=11 // pred_region
          _
        $region16: #{tpu_custom_call.1} parent=11 // pred_fallthru
          _
      $region12: #{tpu_custom_call.1} parent=5 // pred_fallthru
        _
      %p193 = scmp.lt.s32.totalorder %s15, 3
      // Predicated region
      $region17: #{tpu_custom_call.1} parent=5 // pred_check
        %p194 = pneg %p193
      $region18: #{tpu_custom_call.1} parent=5 // pred_check_branch
        %196 = sbr.rel (%p194) target = $region20
      $region19: #{tpu_custom_call.1} parent=5 // pred_region
        // Predicated region
        $region21: #{tpu_custom_call.1} parent=19 // pred_check
          %p197 = pneg %p70
        $region22: #{tpu_custom_call.1} parent=19 // pred_check_branch
          %199 = sbr.rel (%p197) target = $region24
        $region23: #{tpu_custom_call.1} parent=19 // pred_region
          %s200 = sand.u32 %s60, 1
          %s201 = scalar_lea.sflag [#allocation4], %s200
          %s202 = sand.u32 %s60, 1
          %s203 = smul.addr %s202, 32
          %s204 = scalar_lea.vmem [#allocation3], %s203
          %s205 = smul.u32 4, %s23
          %s207 = ssub.s32 512, 512
          %208 = vsyncadd %s201, %s207
          %s209 = smul.addr %s22, 4
          %s210 = sadd.s32 %s205, %s209
          %s211 = smul.addr %s210, 128
          %s212 = scalar_lea.hbm %s1, %s211
          %s213 = sshll.u32 %s204, 4
          %s214 = int_to_ptr.vmem [resolvable:$true] %s213
          %219 = dma.hbm_to_vmem [thread:$0]  %s212, 512, %s214, %s201, 128, 128, 8
        $region24: #{tpu_custom_call.1} parent=19 // pred_fallthru
          _
        // Predicated region
        $region25: #{tpu_custom_call.1} parent=19 // pred_check
          %p220 = pneg %p96
        $region26: #{tpu_custom_call.1} parent=19 // pred_check_branch
          %222 = sbr.rel (%p220) target = $region28
        $region27: #{tpu_custom_call.1} parent=19 // pred_region
          %p223 = scmp.lt.s32.totalorder %s22, 2
          %s224 = scalar_select %p223, %s22, 2
          %s225 = smul.addr %s224, 16
          %s226 = smul.addr %s225, 4
          %s227 = scalar_lea.vmem %s2, %s226
        $region28: #{tpu_custom_call.1} parent=19 // pred_fallthru
          _
        // Predicated region
        $region29: #{tpu_custom_call.1} parent=19 // pred_check
          %p228 = pneg %p122
        $region30: #{tpu_custom_call.1} parent=19 // pred_check_branch
          %230 = sbr.rel (%p228) target = $region32
        $region31: #{tpu_custom_call.1} parent=19 // pred_region
          %p231 = scmp.lt.s32.totalorder %s22, 2
          %s232 = scalar_select %p231, %s22, 2
          %s233 = scalar_lea.vmem %s3, %s232
        $region32: #{tpu_custom_call.1} parent=19 // pred_fallthru
          _
        // Predicated region
        $region33: #{tpu_custom_call.1} parent=19 // pred_check
          %p234 = pneg %p148
        $region34: #{tpu_custom_call.1} parent=19 // pred_check_branch
          %236 = sbr.rel (%p234) target = $region36
        $region35: #{tpu_custom_call.1} parent=19 // pred_region
          %p237 = scmp.lt.s32.totalorder %s22, 2
          %s238 = scalar_select %p237, %s22, 2
          %s239 = smul.addr %s238, 16
          %s240 = smul.addr %s239, 8
          %s241 = scalar_lea.vmem %s4, %s240
        $region36: #{tpu_custom_call.1} parent=19 // pred_fallthru
          _
      $region20: #{tpu_custom_call.1} parent=5 // pred_fallthru
        _
      %p242 = scmp.le.s32.totalorder 1, %s15
      %p243 = scmp.lt.s32.totalorder %s15, 4
      %p244 = pnand %p242, %p243
      %p245 = pneg %p244
      // Predicated region
      $region37: #{tpu_custom_call.1} parent=5 // pred_check
        _
      $region38: #{tpu_custom_call.1} parent=5 // pred_check_branch
        %247 = sbr.rel (%p244) target = $region40
      $region39: #{tpu_custom_call.1} parent=5 // pred_region
        %s248 = ssub.s32 %s15, 1
        %s249 = sand.u32 %s63, 1
        %s250 = scalar_lea.sflag [#allocation4], %s249
        %s251 = sand.u32 %s63, 1
        %s252 = smul.addr %s251, 32
        %s253 = scalar_lea.vmem [#allocation3], %s252
        // Predicated region
        $region41: #{tpu_custom_call.1} parent=39 // pred_check
          %p254 = pneg %p76
        $region42: #{tpu_custom_call.1} parent=39 // pred_check_branch
          %256 = sbr.rel (%p254) target = $region44
        $region43: #{tpu_custom_call.1} parent=39 // pred_region
          %257 = dma.done %s250, 512
        $region44: #{tpu_custom_call.1} parent=39 // pred_fallthru
          _
        %p258 = pneg %p48
        %p259 = pneg %p45
        %s260 = sand.u32 %s63, 1
        %s261 = scalar_lea.sflag [#allocation4], %s260
        %s262 = sand.u32 %s63, 1
        %s263 = smul.addr %s262, 32
        %s264 = scalar_lea.vmem [#allocation3], %s263
        %p265 = pneg %p76
        %p266 = pneg %p73
        %p267 = scmp.lt.s32.totalorder %s24, 2
        %s268 = scalar_select %p267, %s24, 2
        %s269 = smul.addr %s268, 16
        %s270 = smul.addr %s269, 4
        %s271 = scalar_lea.vmem %s2, %s270
        %p272 = pneg %p102
        %p273 = pneg %p99
        %p274 = scmp.lt.s32.totalorder %s24, 2
        %s275 = scalar_select %p274, %s24, 2
        %s276 = scalar_lea.vmem %s3, %s275
        %p277 = pneg %p128
        %p278 = pneg %p125
        %p279 = scmp.lt.s32.totalorder %s24, 2
        %s280 = scalar_select %p279, %s24, 2
        %s281 = smul.addr %s280, 16
        %s282 = smul.addr %s281, 8
        %s283 = scalar_lea.vmem %s4, %s282
        %p284 = pneg %p154
        %p285 = pneg %p151
        %p286 = pneg %p175
        %p287 = pneg %p172
        %s288 = smul.u32 4, %s25
        %p289 = scmp.lt.s32.totalorder %s24, 2
        %s290 = scalar_select %p289, %s24, 2
        %s291 = smul.addr %s290, 16
        %s292 = smul.addr %s291, 4
        %s293 = scalar_lea.vmem %s2, %s292
        %p294 = scmp.lt.s32.totalorder %s24, 2
        %s295 = scalar_select %p294, %s24, 2
        %s296 = scalar_lea.vmem %s3, %s295
        %p297 = scmp.lt.s32.totalorder %s24, 2
        %s298 = scalar_select %p297, %s24, 2
        %s299 = smul.addr %s298, 16
        %s300 = smul.addr %s299, 8
        %s301 = scalar_lea.vmem %s4, %s300
        %p303 = scmp.eq.s32.totalorder %s24, 2
        %p304 = scmp.eq.s32.totalorder %s25, 0
        // Predicated region
        $region45: #{tpu_custom_call.1} parent=39 // pred_check
          %p305 = pneg %p304
        $region46: #{tpu_custom_call.1} parent=39 // pred_check_branch
          %307 = sbr.rel (%p305) target = $region48
        $region47: #{tpu_custom_call.1} parent=39 // pred_region
          %v308 = vld [vmem:[%s293] sm:$0xf]
          %v309 = vld [vmem:[%s293 + $0x4] sm:$0xf]
          %v310 = vld [vmem:[%s293 + $0x8] sm:$0xf]
          %v311 = vld [vmem:[%s293 + $0xc] sm:$0xf]
          %v312 = vld [vmem:[%s293 + $0x10] sm:$0xf]
          %v313 = vld [vmem:[%s293 + $0x14] sm:$0xf]
          %v314 = vld [vmem:[%s293 + $0x18] sm:$0xf]
          %v315 = vld [vmem:[%s293 + $0x1c] sm:$0xf]
          %v316 = vld [vmem:[%s293 + $0x20] sm:$0xf]
          %v317 = vld [vmem:[%s293 + $0x24] sm:$0xf]
          %v318 = vld [vmem:[%s293 + $0x28] sm:$0xf]
          %v319 = vld [vmem:[%s293 + $0x2c] sm:$0xf]
          %v320 = vld [vmem:[%s293 + $0x30] sm:$0xf]
          %v321 = vld [vmem:[%s293 + $0x34] sm:$0xf]
          %v322 = vld [vmem:[%s293 + $0x38] sm:$0xf]
          %v323 = vld [vmem:[%s293 + $0x3c] sm:$0xf]
          %v324 = vld [vmem:[%s301] sm:$0xff]
          %v325 = vld [vmem:[%s301 + $0x8] sm:$0xff]
          %v326 = vld [vmem:[%s301 + $0x10] sm:$0xff]
          %v327 = vld [vmem:[%s301 + $0x18] sm:$0xff]
          %v328 = vld [vmem:[%s301 + $0x20] sm:$0xff]
          %v329 = vld [vmem:[%s301 + $0x28] sm:$0xff]
          %v330 = vld [vmem:[%s301 + $0x30] sm:$0xff]
          %v331 = vld [vmem:[%s301 + $0x38] sm:$0xff]
          %v332 = vld [vmem:[%s301 + $0x40] sm:$0xff]
          %v333 = vld [vmem:[%s301 + $0x48] sm:$0xff]
          %v334 = vld [vmem:[%s301 + $0x50] sm:$0xff]
          %v335 = vld [vmem:[%s301 + $0x58] sm:$0xff]
          %v336 = vld [vmem:[%s301 + $0x60] sm:$0xff]
          %v337 = vld [vmem:[%s301 + $0x68] sm:$0xff]
          %v338 = vld [vmem:[%s301 + $0x70] sm:$0xff]
          %v339 = vld [vmem:[%s301 + $0x78] sm:$0xff]
          %p340 = scmp.eq.s32.totalorder %s24, 0
          // Predicated region
          $region49: #{tpu_custom_call.1} parent=47 // pred_check
            %p341 = pneg %p340
          $region50: #{tpu_custom_call.1} parent=47 // pred_check_branch
            %343 = sbr.rel (%p341) target = $region52
          $region51: #{tpu_custom_call.1} parent=47 // pred_region
            %v344 = vld [vmem:[%s0] sm:$0xff]
            %v345 = vld [vmem:[%s0 + $0x8] sm:$0xff]
            %v346 = vld [vmem:[%s0 + $0x10] sm:$0xff]
            %v347 = vld [vmem:[%s0 + $0x18] sm:$0xff]
            %v348 = vld [vmem:[%s0 + $0x20] sm:$0xff]
            %v349 = vld [vmem:[%s0 + $0x28] sm:$0xff]
            %v350 = vld [vmem:[%s0 + $0x30] sm:$0xff]
            %v351 = vld [vmem:[%s0 + $0x38] sm:$0xff]
            %v352 = vld [vmem:[%s0 + $0x40] sm:$0xff]
            %v353 = vld [vmem:[%s0 + $0x48] sm:$0xff]
            %v354 = vld [vmem:[%s0 + $0x50] sm:$0xff]
            %v355 = vld [vmem:[%s0 + $0x58] sm:$0xff]
            %v356 = vld [vmem:[%s0 + $0x60] sm:$0xff]
            %v357 = vld [vmem:[%s0 + $0x68] sm:$0xff]
            %v358 = vld [vmem:[%s0 + $0x70] sm:$0xff]
            %v359 = vld [vmem:[%s0 + $0x78] sm:$0xff]
            %v360 = vpack.c.bf16 %v345, %v344
            %v361 = vpack.c.bf16 %v347, %v346
            %v362 = vpack.c.bf16 %v349, %v348
            %v363 = vpack.c.bf16 %v351, %v350
            %v364 = vpack.c.bf16 %v353, %v352
            %v365 = vpack.c.bf16 %v355, %v354
            %v366 = vpack.c.bf16 %v357, %v356
            %v367 = vpack.c.bf16 %v359, %v358
            %v384 = vunpack.c.l.b16 %v308
            %v385 = vunpack.c.l.b16 %v309
            %v386 = vunpack.c.l.b16 %v310
            %v387 = vunpack.c.l.b16 %v311
            %v388 = vunpack.c.l.b16 %v312
            %v389 = vunpack.c.l.b16 %v313
            %v390 = vunpack.c.l.b16 %v314
            %v391 = vunpack.c.l.b16 %v315
            %v392 = vunpack.c.l.b16 %v316
            %v393 = vunpack.c.l.b16 %v317
            %v394 = vunpack.c.l.b16 %v318
            %v395 = vunpack.c.l.b16 %v319
            %v396 = vunpack.c.l.b16 %v320
            %v397 = vunpack.c.l.b16 %v321
            %v398 = vunpack.c.l.b16 %v322
            %v399 = vunpack.c.l.b16 %v323
            %v400 = vpack.c.b16 %v385, %v384
            %v401 = vpack.c.b16 %v387, %v386
            %v402 = vpack.c.b16 %v389, %v388
            %v403 = vpack.c.b16 %v391, %v390
            %v404 = vpack.c.b16 %v393, %v392
            %v405 = vpack.c.b16 %v395, %v394
            %v406 = vpack.c.b16 %v397, %v396
            %v407 = vpack.c.b16 %v399, %v398
            %416 = vmatprep.subr.bf16.mxu0 0
            %417 = vmatpush1.bf16.msra.mxu0 %v400
            %418 = vmatprep.subr.bf16.mxu0 0
            %419 = vmatpush1.bf16.msra.mxu0 %v401
            %420 = vmatprep.subr.bf16.mxu0 0
            %421 = vmatpush1.bf16.msra.mxu0 %v402
            %422 = vmatprep.subr.bf16.mxu0 0
            %423 = vmatpush1.bf16.msra.mxu0 %v403
            %424 = vmatprep.subr.bf16.mxu0 0
            %425 = vmatpush1.bf16.msra.mxu0 %v404
            %426 = vmatprep.subr.bf16.mxu0 0
            %427 = vmatpush1.bf16.msra.mxu0 %v405
            %428 = vmatprep.subr.bf16.mxu0 0
            %429 = vmatpush1.bf16.msra.mxu0 %v406
            %430 = vmatprep.subr.bf16.mxu0 0
            %431 = vmatpush1.bf16.msra.mxu0 %v407
            %432 = vmatprep.subr.bf16.mxu0 0
            %433 = vmatpush1.bf16.msra.mxu0 0
            %434 = vmatprep.subr.bf16.mxu0 0
            %435 = vmatpush1.bf16.msra.mxu0 0
            %436 = vmatprep.subr.bf16.mxu0 0
            %437 = vmatpush1.bf16.msra.mxu0 0
            %438 = vmatprep.subr.bf16.mxu0 0
            %439 = vmatpush1.bf16.msra.mxu0 0
            %440 = vmatprep.subr.bf16.mxu0 0
            %441 = vmatpush1.bf16.msra.mxu0 0
            %442 = vmatprep.subr.bf16.mxu0 0
            %443 = vmatpush1.bf16.msra.mxu0 0
            %444 = vmatprep.subr.bf16.mxu0 0
            %445 = vmatpush1.bf16.msra.mxu0 0
            %446 = vmatprep.subr.bf16.mxu0 0
            %447 = vmatpush1.bf16.msra.mxu0 0
            %448 = vmatprep.mubr.bf16.mxu0 0
            %449 = vmatmul.mubr.bf16.gmra.mrb[0].mxu0 %v360
            %v450 = vpop.f32.mrb[0].mxu0
            %v451 = vadd.f32 0.0, %v450
            %v452 = vpop.f32.mrb[0].mxu0
            %v453 = vpop.f32.mrb[0].mxu0
            %v454 = vadd.f32 0.0, %v453
            %v455 = vpop.f32.mrb[0].mxu0
            %456 = vmatprep.mubr.bf16.mxu0 0
            %457 = vmatmul.mubr.bf16.gmra.mrb[0].mxu0 %v361
            %v458 = vpop.f32.mrb[0].mxu0
            %v459 = vadd.f32 0.0, %v458
            %v460 = vpop.f32.mrb[0].mxu0
            %v461 = vpop.f32.mrb[0].mxu0
            %v462 = vadd.f32 0.0, %v461
            %v463 = vpop.f32.mrb[0].mxu0
            %464 = vmatprep.mubr.bf16.mxu0 0
            %465 = vmatmul.mubr.bf16.gmra.mrb[0].mxu0 %v362
            %v466 = vpop.f32.mrb[0].mxu0
            %v467 = vadd.f32 0.0, %v466
            %v468 = vpop.f32.mrb[0].mxu0
            %v469 = vpop.f32.mrb[0].mxu0
            %v470 = vadd.f32 0.0, %v469
            %v471 = vpop.f32.mrb[0].mxu0
            %472 = vmatprep.mubr.bf16.mxu0 0
            %473 = vmatmul.mubr.bf16.gmra.mrb[0].mxu0 %v363
            %v474 = vpop.f32.mrb[0].mxu0
            %v475 = vadd.f32 0.0, %v474
            %v476 = vpop.f32.mrb[0].mxu0
            %v477 = vpop.f32.mrb[0].mxu0
            %v478 = vadd.f32 0.0, %v477
            %v479 = vpop.f32.mrb[0].mxu0
            %480 = vmatprep.mubr.bf16.mxu0 0
            %481 = vmatmul.mubr.bf16.gmra.mrb[0].mxu0 %v364
            %v482 = vpop.f32.mrb[0].mxu0
            %v483 = vadd.f32 0.0, %v482
            %v484 = vpop.f32.mrb[0].mxu0
            %v485 = vpop.f32.mrb[0].mxu0
            %v486 = vadd.f32 0.0, %v485
            %v487 = vpop.f32.mrb[0].mxu0
            %488 = vmatprep.mubr.bf16.mxu0 0
            %489 = vmatmul.mubr.bf16.gmra.mrb[0].mxu0 %v365
            %v490 = vpop.f32.mrb[0].mxu0
            %v491 = vadd.f32 0.0, %v490
            %v492 = vpop.f32.mrb[0].mxu0
            %v493 = vpop.f32.mrb[0].mxu0
            %v494 = vadd.f32 0.0, %v493
            %v495 = vpop.f32.mrb[0].mxu0
            %496 = vmatprep.mubr.bf16.mxu0 0
            %497 = vmatmul.mubr.bf16.gmra.mrb[0].mxu0 %v366
            %v498 = vpop.f32.mrb[0].mxu0
            %v499 = vadd.f32 0.0, %v498
            %v500 = vpop.f32.mrb[0].mxu0
            %v501 = vpop.f32.mrb[0].mxu0
            %v502 = vadd.f32 0.0, %v501
            %v503 = vpop.f32.mrb[0].mxu0
            %504 = vmatprep.mubr.bf16.mxu0 0
            %505 = vmatmul.mubr.bf16.gmra.mrb[0].mxu0 %v367
            %v506 = vpop.f32.mrb[0].mxu0
            %v507 = vadd.f32 0.0, %v506
            %v508 = vpop.f32.mrb[0].mxu0
            %v509 = vpop.f32.mrb[0].mxu0
            %v510 = vadd.f32 0.0, %v509
            %v511 = vpop.f32.mrb[0].mxu0
            %512 = vdwg.mxu0
            %514 = vset.pattern.permute.xlu0 0
            %515 = vperm.xlu0 %514, %v324
            %v516 = vpop.permute.xlu0 %515
            %519 = vset.pattern.permute.xlu0 0
            %520 = vperm.xlu0 %519, %v325
            %v521 = vpop.permute.xlu0 %520
            %524 = vset.pattern.permute.xlu0 0
            %525 = vperm.xlu0 %524, %v326
            %v526 = vpop.permute.xlu0 %525
            %529 = vset.pattern.permute.xlu0 0
            %530 = vperm.xlu0 %529, %v327
            %v531 = vpop.permute.xlu0 %530
            %534 = vset.pattern.permute.xlu0 0
            %535 = vperm.xlu0 %534, %v328
            %v536 = vpop.permute.xlu0 %535
            %539 = vset.pattern.permute.xlu0 0
            %540 = vperm.xlu0 %539, %v329
            %v541 = vpop.permute.xlu0 %540
            %544 = vset.pattern.permute.xlu0 0
            %545 = vperm.xlu0 %544, %v330
            %v546 = vpop.permute.xlu0 %545
            %549 = vset.pattern.permute.xlu0 0
            %550 = vperm.xlu0 %549, %v331
            %v551 = vpop.permute.xlu0 %550
            %554 = vset.pattern.permute.xlu0 0
            %555 = vperm.xlu0 %554, %v332
            %v556 = vpop.permute.xlu0 %555
            %559 = vset.pattern.permute.xlu0 0
            %560 = vperm.xlu0 %559, %v333
            %v561 = vpop.permute.xlu0 %560
            %564 = vset.pattern.permute.xlu0 0
            %565 = vperm.xlu0 %564, %v334
            %v566 = vpop.permute.xlu0 %565
            %569 = vset.pattern.permute.xlu0 0
            %570 = vperm.xlu0 %569, %v335
            %v571 = vpop.permute.xlu0 %570
            %574 = vset.pattern.permute.xlu0 0
            %575 = vperm.xlu0 %574, %v336
            %v576 = vpop.permute.xlu0 %575
            %579 = vset.pattern.permute.xlu0 0
            %580 = vperm.xlu0 %579, %v337
            %v581 = vpop.permute.xlu0 %580
            %584 = vset.pattern.permute.xlu0 0
            %585 = vperm.xlu0 %584, %v338
            %v586 = vpop.permute.xlu0 %585
            %589 = vset.pattern.permute.xlu0 0
            %590 = vperm.xlu0 %589, %v339
            %v591 = vpop.permute.xlu0 %590
            %v593 = vmul.f32 %v451, %v516
            %v594 = vmul.f32 %v454, %v521
            %v595 = vmul.f32 %v459, %v526
            %v596 = vmul.f32 %v462, %v531
            %v597 = vmul.f32 %v467, %v536
            %v598 = vmul.f32 %v470, %v541
            %v599 = vmul.f32 %v475, %v546
            %v600 = vmul.f32 %v478, %v551
            %v601 = vmul.f32 %v483, %v556
            %v602 = vmul.f32 %v486, %v561
            %v603 = vmul.f32 %v491, %v566
            %v604 = vmul.f32 %v494, %v571
            %v605 = vmul.f32 %v499, %v576
            %v606 = vmul.f32 %v502, %v581
            %v607 = vmul.f32 %v507, %v586
            %v608 = vmul.f32 %v510, %v591
            %v609 = vpack.c.bf16 %v594, %v593
            %v610 = vpack.c.bf16 %v596, %v595
            %v611 = vpack.c.bf16 %v598, %v597
            %v612 = vpack.c.bf16 %v600, %v599
            %v613 = vpack.c.bf16 %v602, %v601
            %v614 = vpack.c.bf16 %v604, %v603
            %v615 = vpack.c.bf16 %v606, %v605
            %v616 = vpack.c.bf16 %v608, %v607
            %617 = vst [vmem:[#allocation2] sm:$0xff] %v609
            %618 = vst [vmem:[#allocation2 + $0x8] sm:$0xff] %v610
            %619 = vst [vmem:[#allocation2 + $0x10] sm:$0xff] %v611
            %620 = vst [vmem:[#allocation2 + $0x18] sm:$0xff] %v612
            %621 = vst [vmem:[#allocation2 + $0x20] sm:$0xff] %v613
            %622 = vst [vmem:[#allocation2 + $0x28] sm:$0xff] %v614
            %623 = vst [vmem:[#allocation2 + $0x30] sm:$0xff] %v615
            %624 = vst [vmem:[#allocation2 + $0x38] sm:$0xff] %v616
          $region52: #{tpu_custom_call.1} parent=47 // pred_fallthru
            _
          %p625 = scmp.ne.s32.totalorder %s24, 0
          // Predicated region
          $region53: #{tpu_custom_call.1} parent=47 // pred_check
            %p626 = pneg %p625
          $region54: #{tpu_custom_call.1} parent=47 // pred_check_branch
            %628 = sbr.rel (%p626) target = $region56
          $region55: #{tpu_custom_call.1} parent=47 // pred_region
            %v629 = vld [vmem:[#allocation6] sm:$0xff]
            %v630 = vld [vmem:[#allocation6 + $0x8] sm:$0xff]
            %v631 = vld [vmem:[#allocation6 + $0x10] sm:$0xff]
            %v632 = vld [vmem:[#allocation6 + $0x18] sm:$0xff]
            %v633 = vld [vmem:[#allocation6 + $0x20] sm:$0xff]
            %v634 = vld [vmem:[#allocation6 + $0x28] sm:$0xff]
            %v635 = vld [vmem:[#allocation6 + $0x30] sm:$0xff]
            %v636 = vld [vmem:[#allocation6 + $0x38] sm:$0xff]
            %v637 = vld [vmem:[#allocation6 + $0x40] sm:$0xff]
            %v638 = vld [vmem:[#allocation6 + $0x48] sm:$0xff]
            %v639 = vld [vmem:[#allocation6 + $0x50] sm:$0xff]
            %v640 = vld [vmem:[#allocation6 + $0x58] sm:$0xff]
            %v641 = vld [vmem:[#allocation6 + $0x60] sm:$0xff]
            %v642 = vld [vmem:[#allocation6 + $0x68] sm:$0xff]
            %v643 = vld [vmem:[#allocation6 + $0x70] sm:$0xff]
            %v644 = vld [vmem:[#allocation6 + $0x78] sm:$0xff]
            %v645 = vpack.c.bf16 %v630, %v629
            %v646 = vpack.c.bf16 %v632, %v631
            %v647 = vpack.c.bf16 %v634, %v633
            %v648 = vpack.c.bf16 %v636, %v635
            %v649 = vpack.c.bf16 %v638, %v637
            %v650 = vpack.c.bf16 %v640, %v639
            %v651 = vpack.c.bf16 %v642, %v641
            %v652 = vpack.c.bf16 %v644, %v643
            %v669 = vunpack.c.l.b16 %v308
            %v670 = vunpack.c.l.b16 %v309
            %v671 = vunpack.c.l.b16 %v310
            %v672 = vunpack.c.l.b16 %v311
            %v673 = vunpack.c.l.b16 %v312
            %v674 = vunpack.c.l.b16 %v313
            %v675 = vunpack.c.l.b16 %v314
            %v676 = vunpack.c.l.b16 %v315
            %v677 = vunpack.c.l.b16 %v316
            %v678 = vunpack.c.l.b16 %v317
            %v679 = vunpack.c.l.b16 %v318
            %v680 = vunpack.c.l.b16 %v319
            %v681 = vunpack.c.l.b16 %v320
            %v682 = vunpack.c.l.b16 %v321
            %v683 = vunpack.c.l.b16 %v322
            %v684 = vunpack.c.l.b16 %v323
            %v685 = vpack.c.b16 %v670, %v669
            %v686 = vpack.c.b16 %v672, %v671
            %v687 = vpack.c.b16 %v674, %v673
            %v688 = vpack.c.b16 %v676, %v675
            %v689 = vpack.c.b16 %v678, %v677
            %v690 = vpack.c.b16 %v680, %v679
            %v691 = vpack.c.b16 %v682, %v681
            %v692 = vpack.c.b16 %v684, %v683
            %701 = vmatprep.subr.bf16.mxu0 0
            %702 = vmatpush1.bf16.msra.mxu0 %v685
            %703 = vmatprep.subr.bf16.mxu0 0
            %704 = vmatpush1.bf16.msra.mxu0 %v686
            %705 = vmatprep.subr.bf16.mxu0 0
            %706 = vmatpush1.bf16.msra.mxu0 %v687
            %707 = vmatprep.subr.bf16.mxu0 0
            %708 = vmatpush1.bf16.msra.mxu0 %v688
            %709 = vmatprep.subr.bf16.mxu0 0
            %710 = vmatpush1.bf16.msra.mxu0 %v689
            %711 = vmatprep.subr.bf16.mxu0 0
            %712 = vmatpush1.bf16.msra.mxu0 %v690
            %713 = vmatprep.subr.bf16.mxu0 0
            %714 = vmatpush1.bf16.msra.mxu0 %v691
            %715 = vmatprep.subr.bf16.mxu0 0
            %716 = vmatpush1.bf16.msra.mxu0 %v692
            %717 = vmatprep.subr.bf16.mxu0 0
            %718 = vmatpush1.bf16.msra.mxu0 0
            %719 = vmatprep.subr.bf16.mxu0 0
            %720 = vmatpush1.bf16.msra.mxu0 0
            %721 = vmatprep.subr.bf16.mxu0 0
            %722 = vmatpush1.bf16.msra.mxu0 0
            %723 = vmatprep.subr.bf16.mxu0 0
            %724 = vmatpush1.bf16.msra.mxu0 0
            %725 = vmatprep.subr.bf16.mxu0 0
            %726 = vmatpush1.bf16.msra.mxu0 0
            %727 = vmatprep.subr.bf16.mxu0 0
            %728 = vmatpush1.bf16.msra.mxu0 0
            %729 = vmatprep.subr.bf16.mxu0 0
            %730 = vmatpush1.bf16.msra.mxu0 0
            %731 = vmatprep.subr.bf16.mxu0 0
            %732 = vmatpush1.bf16.msra.mxu0 0
            %733 = vmatprep.mubr.bf16.mxu0 0
            %734 = vmatmul.mubr.bf16.gmra.mrb[0].mxu0 %v645
            %v735 = vpop.f32.mrb[0].mxu0
            %v736 = vadd.f32 0.0, %v735
            %v737 = vpop.f32.mrb[0].mxu0
            %v738 = vpop.f32.mrb[0].mxu0
            %v739 = vadd.f32 0.0, %v738
            %v740 = vpop.f32.mrb[0].mxu0
            %741 = vmatprep.mubr.bf16.mxu0 0
            %742 = vmatmul.mubr.bf16.gmra.mrb[0].mxu0 %v646
            %v743 = vpop.f32.mrb[0].mxu0
            %v744 = vadd.f32 0.0, %v743
            %v745 = vpop.f32.mrb[0].mxu0
            %v746 = vpop.f32.mrb[0].mxu0
            %v747 = vadd.f32 0.0, %v746
            %v748 = vpop.f32.mrb[0].mxu0
            %749 = vmatprep.mubr.bf16.mxu0 0
            %750 = vmatmul.mubr.bf16.gmra.mrb[0].mxu0 %v647
            %v751 = vpop.f32.mrb[0].mxu0
            %v752 = vadd.f32 0.0, %v751
            %v753 = vpop.f32.mrb[0].mxu0
            %v754 = vpop.f32.mrb[0].mxu0
            %v755 = vadd.f32 0.0, %v754
            %v756 = vpop.f32.mrb[0].mxu0
            %757 = vmatprep.mubr.bf16.mxu0 0
            %758 = vmatmul.mubr.bf16.gmra.mrb[0].mxu0 %v648
            %v759 = vpop.f32.mrb[0].mxu0
            %v760 = vadd.f32 0.0, %v759
            %v761 = vpop.f32.mrb[0].mxu0
            %v762 = vpop.f32.mrb[0].mxu0
            %v763 = vadd.f32 0.0, %v762
            %v764 = vpop.f32.mrb[0].mxu0
            %765 = vmatprep.mubr.bf16.mxu0 0
            %766 = vmatmul.mubr.bf16.gmra.mrb[0].mxu0 %v649
            %v767 = vpop.f32.mrb[0].mxu0
            %v768 = vadd.f32 0.0, %v767
            %v769 = vpop.f32.mrb[0].mxu0
            %v770 = vpop.f32.mrb[0].mxu0
            %v771 = vadd.f32 0.0, %v770
            %v772 = vpop.f32.mrb[0].mxu0
            %773 = vmatprep.mubr.bf16.mxu0 0
            %774 = vmatmul.mubr.bf16.gmra.mrb[0].mxu0 %v650
            %v775 = vpop.f32.mrb[0].mxu0
            %v776 = vadd.f32 0.0, %v775
            %v777 = vpop.f32.mrb[0].mxu0
            %v778 = vpop.f32.mrb[0].mxu0
            %v779 = vadd.f32 0.0, %v778
            %v780 = vpop.f32.mrb[0].mxu0
            %781 = vmatprep.mubr.bf16.mxu0 0
            %782 = vmatmul.mubr.bf16.gmra.mrb[0].mxu0 %v651
            %v783 = vpop.f32.mrb[0].mxu0
            %v784 = vadd.f32 0.0, %v783
            %v785 = vpop.f32.mrb[0].mxu0
            %v786 = vpop.f32.mrb[0].mxu0
            %v787 = vadd.f32 0.0, %v786
            %v788 = vpop.f32.mrb[0].mxu0
            %789 = vmatprep.mubr.bf16.mxu0 0
            %790 = vmatmul.mubr.bf16.gmra.mrb[0].mxu0 %v652
            %v791 = vpop.f32.mrb[0].mxu0
            %v792 = vadd.f32 0.0, %v791
            %v793 = vpop.f32.mrb[0].mxu0
            %v794 = vpop.f32.mrb[0].mxu0
            %v795 = vadd.f32 0.0, %v794
            %v796 = vpop.f32.mrb[0].mxu0
            %797 = vdwg.mxu0
            %799 = vset.pattern.permute.xlu0 0
            %800 = vperm.xlu0 %799, %v324
            %v801 = vpop.permute.xlu0 %800
            %804 = vset.pattern.permute.xlu0 0
            %805 = vperm.xlu0 %804, %v325
            %v806 = vpop.permute.xlu0 %805
            %809 = vset.pattern.permute.xlu0 0
            %810 = vperm.xlu0 %809, %v326
            %v811 = vpop.permute.xlu0 %810
            %814 = vset.pattern.permute.xlu0 0
            %815 = vperm.xlu0 %814, %v327
            %v816 = vpop.permute.xlu0 %815
            %819 = vset.pattern.permute.xlu0 0
            %820 = vperm.xlu0 %819, %v328
            %v821 = vpop.permute.xlu0 %820
            %824 = vset.pattern.permute.xlu0 0
            %825 = vperm.xlu0 %824, %v329
            %v826 = vpop.permute.xlu0 %825
            %829 = vset.pattern.permute.xlu0 0
            %830 = vperm.xlu0 %829, %v330
            %v831 = vpop.permute.xlu0 %830
            %834 = vset.pattern.permute.xlu0 0
            %835 = vperm.xlu0 %834, %v331
            %v836 = vpop.permute.xlu0 %835
            %839 = vset.pattern.permute.xlu0 0
            %840 = vperm.xlu0 %839, %v332
            %v841 = vpop.permute.xlu0 %840
            %844 = vset.pattern.permute.xlu0 0
            %845 = vperm.xlu0 %844, %v333
            %v846 = vpop.permute.xlu0 %845
            %849 = vset.pattern.permute.xlu0 0
            %850 = vperm.xlu0 %849, %v334
            %v851 = vpop.permute.xlu0 %850
            %854 = vset.pattern.permute.xlu0 0
            %855 = vperm.xlu0 %854, %v335
            %v856 = vpop.permute.xlu0 %855
            %859 = vset.pattern.permute.xlu0 0
            %860 = vperm.xlu0 %859, %v336
            %v861 = vpop.permute.xlu0 %860
            %864 = vset.pattern.permute.xlu0 0
            %865 = vperm.xlu0 %864, %v337
            %v866 = vpop.permute.xlu0 %865
            %869 = vset.pattern.permute.xlu0 0
            %870 = vperm.xlu0 %869, %v338
            %v871 = vpop.permute.xlu0 %870
            %874 = vset.pattern.permute.xlu0 0
            %875 = vperm.xlu0 %874, %v339
            %v876 = vpop.permute.xlu0 %875
            %v878 = vmul.f32 %v736, %v801
            %v879 = vmul.f32 %v739, %v806
            %v880 = vmul.f32 %v744, %v811
            %v881 = vmul.f32 %v747, %v816
            %v882 = vmul.f32 %v752, %v821
            %v883 = vmul.f32 %v755, %v826
            %v884 = vmul.f32 %v760, %v831
            %v885 = vmul.f32 %v763, %v836
            %v886 = vmul.f32 %v768, %v841
            %v887 = vmul.f32 %v771, %v846
            %v888 = vmul.f32 %v776, %v851
            %v889 = vmul.f32 %v779, %v856
            %v890 = vmul.f32 %v784, %v861
            %v891 = vmul.f32 %v787, %v866
            %v892 = vmul.f32 %v792, %v871
            %v893 = vmul.f32 %v795, %v876
            %v894 = vpack.c.bf16 %v879, %v878
            %v895 = vpack.c.bf16 %v881, %v880
            %v896 = vpack.c.bf16 %v883, %v882
            %v897 = vpack.c.bf16 %v885, %v884
            %v898 = vpack.c.bf16 %v887, %v886
            %v899 = vpack.c.bf16 %v889, %v888
            %v900 = vpack.c.bf16 %v891, %v890
            %v901 = vpack.c.bf16 %v893, %v892
            %902 = vst [vmem:[#allocation2] sm:$0xff] %v894
            %903 = vst [vmem:[#allocation2 + $0x8] sm:$0xff] %v895
            %904 = vst [vmem:[#allocation2 + $0x10] sm:$0xff] %v896
            %905 = vst [vmem:[#allocation2 + $0x18] sm:$0xff] %v897
            %906 = vst [vmem:[#allocation2 + $0x20] sm:$0xff] %v898
            %907 = vst [vmem:[#allocation2 + $0x28] sm:$0xff] %v899
            %908 = vst [vmem:[#allocation2 + $0x30] sm:$0xff] %v900
            %909 = vst [vmem:[#allocation2 + $0x38] sm:$0xff] %v901
          $region56: #{tpu_custom_call.1} parent=47 // pred_fallthru
            _
        $region48: #{tpu_custom_call.1} parent=39 // pred_fallthru
          _
        %v910 = vld [vmem:[%s253] sm:$0xff]
        %v911 = vld [vmem:[%s253 + $0x8] sm:$0xff]
        %v912 = vld [vmem:[%s253 + $0x10] sm:$0xff]
        %v913 = vld [vmem:[%s253 + $0x18] sm:$0xff]
        %v914 = vunpack.c.l.s8.bf16 %v910
        %v915 = vunpack.c.h.s8.bf16 %v910
        %v916 = vunpack.c.l.s8.bf16 %v911
        %v917 = vunpack.c.h.s8.bf16 %v911
        %v918 = vunpack.c.l.s8.bf16 %v912
        %v919 = vunpack.c.h.s8.bf16 %v912
        %v920 = vunpack.c.l.s8.bf16 %v913
        %v921 = vunpack.c.h.s8.bf16 %v913
        %v922 = vunpack.c.l.bf16 %v914
        %v923 = vunpack.c.h.bf16 %v914
        %v924 = vunpack.c.l.bf16 %v915
        %v925 = vunpack.c.h.bf16 %v915
        %v926 = vunpack.c.l.bf16 %v916
        %v927 = vunpack.c.h.bf16 %v916
        %v928 = vunpack.c.l.bf16 %v917
        %v929 = vunpack.c.h.bf16 %v917
        %v930 = vunpack.c.l.bf16 %v918
        %v931 = vunpack.c.h.bf16 %v918
        %v932 = vunpack.c.l.bf16 %v919
        %v933 = vunpack.c.h.bf16 %v919
        %v934 = vunpack.c.l.bf16 %v920
        %v935 = vunpack.c.h.bf16 %v920
        %v936 = vunpack.c.l.bf16 %v921
        %v937 = vunpack.c.h.bf16 %v921
        %938 = vadd.xlane.f32.xlu0 %v922
        %v939 = vpop.xlane.xlu0 %938
        %940 = vadd.xlane.f32.xlu0 %v923
        %v941 = vpop.xlane.xlu0 %940
        %942 = vadd.xlane.f32.xlu0 %v924
        %v943 = vpop.xlane.xlu0 %942
        %944 = vadd.xlane.f32.xlu0 %v925
        %v945 = vpop.xlane.xlu0 %944
        %946 = vadd.xlane.f32.xlu0 %v926
        %v947 = vpop.xlane.xlu0 %946
        %948 = vadd.xlane.f32.xlu0 %v927
        %v949 = vpop.xlane.xlu0 %948
        %950 = vadd.xlane.f32.xlu0 %v928
        %v951 = vpop.xlane.xlu0 %950
        %952 = vadd.xlane.f32.xlu0 %v929
        %v953 = vpop.xlane.xlu0 %952
        %954 = vadd.xlane.f32.xlu0 %v930
        %v955 = vpop.xlane.xlu0 %954
        %956 = vadd.xlane.f32.xlu0 %v931
        %v957 = vpop.xlane.xlu0 %956
        %958 = vadd.xlane.f32.xlu0 %v932
        %v959 = vpop.xlane.xlu0 %958
        %960 = vadd.xlane.f32.xlu0 %v933
        %v961 = vpop.xlane.xlu0 %960
        %962 = vadd.xlane.f32.xlu0 %v934
        %v963 = vpop.xlane.xlu0 %962
        %964 = vadd.xlane.f32.xlu0 %v935
        %v965 = vpop.xlane.xlu0 %964
        %966 = vadd.xlane.f32.xlu0 %v936
        %v967 = vpop.xlane.xlu0 %966
        %968 = vadd.xlane.f32.xlu0 %v937
        %v969 = vpop.xlane.xlu0 %968
        %v970 = vmax.f32 %v939, 1.0
        %v971 = vmax.f32 %v941, 1.0
        %v972 = vmax.f32 %v943, 1.0
        %v973 = vmax.f32 %v945, 1.0
        %v974 = vmax.f32 %v947, 1.0
        %v975 = vmax.f32 %v949, 1.0
        %v976 = vmax.f32 %v951, 1.0
        %v977 = vmax.f32 %v953, 1.0
        %v978 = vmax.f32 %v955, 1.0
        %v979 = vmax.f32 %v957, 1.0
        %v980 = vmax.f32 %v959, 1.0
        %v981 = vmax.f32 %v961, 1.0
        %v982 = vmax.f32 %v963, 1.0
        %v983 = vmax.f32 %v965, 1.0
        %v984 = vmax.f32 %v967, 1.0
        %v985 = vmax.f32 %v969, 1.0
        %v986 = vrsqrt.pop %v970
        %v987 = vrsqrt.pop %v971
        %v988 = vrsqrt.pop %v972
        %v989 = vrsqrt.pop %v973
        %v990 = vrsqrt.pop %v974
        %v991 = vrsqrt.pop %v975
        %v992 = vrsqrt.pop %v976
        %v993 = vrsqrt.pop %v977
        %v994 = vrsqrt.pop %v978
        %v995 = vrsqrt.pop %v979
        %v996 = vrsqrt.pop %v980
        %v997 = vrsqrt.pop %v981
        %v998 = vrsqrt.pop %v982
        %v999 = vrsqrt.pop %v983
        %v1000 = vrsqrt.pop %v984
        %v1001 = vrsqrt.pop %v985
        %v1002 = vld [vmem:[#allocation2] sm:$0xff]
        %v1003 = vld [vmem:[#allocation2 + $0x8] sm:$0xff]
        %v1004 = vld [vmem:[#allocation2 + $0x10] sm:$0xff]
        %v1005 = vld [vmem:[#allocation2 + $0x18] sm:$0xff]
        %v1006 = vld [vmem:[#allocation2 + $0x20] sm:$0xff]
        %v1007 = vld [vmem:[#allocation2 + $0x28] sm:$0xff]
        %v1008 = vld [vmem:[#allocation2 + $0x30] sm:$0xff]
        %v1009 = vld [vmem:[#allocation2 + $0x38] sm:$0xff]
        %1010 = vmatprep.subr.bf16.mxu0 0
        %1011 = vmatpush1.bf16.msra.mxu0 %v1002
        %1012 = vmatprep.subr.bf16.mxu0 0
        %1013 = vmatpush1.bf16.msra.mxu0 %v1003
        %1014 = vmatprep.subr.bf16.mxu0 0
        %1015 = vmatpush1.bf16.msra.mxu0 %v1004
        %1016 = vmatprep.subr.bf16.mxu0 0
        %1017 = vmatpush1.bf16.msra.mxu0 %v1005
        %1018 = vmatprep.subr.bf16.mxu0 0
        %1019 = vmatpush1.bf16.msra.mxu0 %v1006
        %1020 = vmatprep.subr.bf16.mxu0 0
        %1021 = vmatpush1.bf16.msra.mxu0 %v1007
        %1022 = vmatprep.subr.bf16.mxu0 0
        %1023 = vmatpush1.bf16.msra.mxu0 %v1008
        %1024 = vmatprep.subr.bf16.mxu0 0
        %1025 = vmatpush1.bf16.msra.mxu0 %v1009
        %1026 = vmatprep.subr.bf16.mxu0 0
        %1027 = vmatpush1.bf16.msra.mxu0 0
        %1028 = vmatprep.subr.bf16.mxu0 0
        %1029 = vmatpush1.bf16.msra.mxu0 0
        %1030 = vmatprep.subr.bf16.mxu0 0
        %1031 = vmatpush1.bf16.msra.mxu0 0
        %1032 = vmatprep.subr.bf16.mxu0 0
        %1033 = vmatpush1.bf16.msra.mxu0 0
        %1034 = vmatprep.subr.bf16.mxu0 0
        %1035 = vmatpush1.bf16.msra.mxu0 0
        %1036 = vmatprep.subr.bf16.mxu0 0
        %1037 = vmatpush1.bf16.msra.mxu0 0
        %1038 = vmatprep.subr.bf16.mxu0 0
        %1039 = vmatpush1.bf16.msra.mxu0 0
        %1040 = vmatprep.subr.bf16.mxu0 0
        %1041 = vmatpush1.bf16.msra.mxu0 0
        %1042 = vmatprep.mubr.bf16.mxu0 0
        %1043 = vmatmul.mubr.bf16.gmra.mrb[0].mxu0 %v914
        %v1044 = vpop.f32.mrb[0].mxu0
        %v1045 = vadd.f32 0.0, %v1044
        %v1046 = vpop.f32.mrb[0].mxu0
        %v1047 = vpop.f32.mrb[0].mxu0
        %v1048 = vadd.f32 0.0, %v1047
        %v1049 = vpop.f32.mrb[0].mxu0
        %1050 = vmatprep.mubr.bf16.mxu0 0
        %1051 = vmatmul.mubr.bf16.gmra.mrb[0].mxu0 %v915
        %v1052 = vpop.f32.mrb[0].mxu0
        %v1053 = vadd.f32 0.0, %v1052
        %v1054 = vpop.f32.mrb[0].mxu0
        %v1055 = vpop.f32.mrb[0].mxu0
        %v1056 = vadd.f32 0.0, %v1055
        %v1057 = vpop.f32.mrb[0].mxu0
        %1058 = vmatprep.mubr.bf16.mxu0 0
        %1059 = vmatmul.mubr.bf16.gmra.mrb[0].mxu0 %v916
        %v1060 = vpop.f32.mrb[0].mxu0
        %v1061 = vadd.f32 0.0, %v1060
        %v1062 = vpop.f32.mrb[0].mxu0
        %v1063 = vpop.f32.mrb[0].mxu0
        %v1064 = vadd.f32 0.0, %v1063
        %v1065 = vpop.f32.mrb[0].mxu0
        %1066 = vmatprep.mubr.bf16.mxu0 0
        %1067 = vmatmul.mubr.bf16.gmra.mrb[0].mxu0 %v917
        %v1068 = vpop.f32.mrb[0].mxu0
        %v1069 = vadd.f32 0.0, %v1068
        %v1070 = vpop.f32.mrb[0].mxu0
        %v1071 = vpop.f32.mrb[0].mxu0
        %v1072 = vadd.f32 0.0, %v1071
        %v1073 = vpop.f32.mrb[0].mxu0
        %1074 = vmatprep.mubr.bf16.mxu0 0
        %1075 = vmatmul.mubr.bf16.gmra.mrb[0].mxu0 %v918
        %v1076 = vpop.f32.mrb[0].mxu0
        %v1077 = vadd.f32 0.0, %v1076
        %v1078 = vpop.f32.mrb[0].mxu0
        %v1079 = vpop.f32.mrb[0].mxu0
        %v1080 = vadd.f32 0.0, %v1079
        %v1081 = vpop.f32.mrb[0].mxu0
        %1082 = vmatprep.mubr.bf16.mxu0 0
        %1083 = vmatmul.mubr.bf16.gmra.mrb[0].mxu0 %v919
        %v1084 = vpop.f32.mrb[0].mxu0
        %v1085 = vadd.f32 0.0, %v1084
        %v1086 = vpop.f32.mrb[0].mxu0
        %v1087 = vpop.f32.mrb[0].mxu0
        %v1088 = vadd.f32 0.0, %v1087
        %v1089 = vpop.f32.mrb[0].mxu0
        %1090 = vmatprep.mubr.bf16.mxu0 0
        %1091 = vmatmul.mubr.bf16.gmra.mrb[0].mxu0 %v920
        %v1092 = vpop.f32.mrb[0].mxu0
        %v1093 = vadd.f32 0.0, %v1092
        %v1094 = vpop.f32.mrb[0].mxu0
        %v1095 = vpop.f32.mrb[0].mxu0
        %v1096 = vadd.f32 0.0, %v1095
        %v1097 = vpop.f32.mrb[0].mxu0
        %1098 = vmatprep.mubr.bf16.mxu0 0
        %1099 = vmatmul.mubr.bf16.gmra.mrb[0].mxu0 %v921
        %v1100 = vpop.f32.mrb[0].mxu0
        %v1101 = vadd.f32 0.0, %v1100
        %v1102 = vpop.f32.mrb[0].mxu0
        %v1103 = vpop.f32.mrb[0].mxu0
        %v1104 = vadd.f32 0.0, %v1103
        %v1105 = vpop.f32.mrb[0].mxu0
        %1106 = vdwg.mxu0
        %v1107 = vmul.f32 %v1045, %v986
        %v1108 = vmul.f32 %v1048, %v987
        %v1109 = vmul.f32 %v1053, %v988
        %v1110 = vmul.f32 %v1056, %v989
        %v1111 = vmul.f32 %v1061, %v990
        %v1112 = vmul.f32 %v1064, %v991
        %v1113 = vmul.f32 %v1069, %v992
        %v1114 = vmul.f32 %v1072, %v993
        %v1115 = vmul.f32 %v1077, %v994
        %v1116 = vmul.f32 %v1080, %v995
        %v1117 = vmul.f32 %v1085, %v996
        %v1118 = vmul.f32 %v1088, %v997
        %v1119 = vmul.f32 %v1093, %v998
        %v1120 = vmul.f32 %v1096, %v999
        %v1121 = vmul.f32 %v1101, %v1000
        %v1122 = vmul.f32 %v1104, %v1001
        %v1123 = vld [vmem:[%s296] sm:$0x1]
        %v1125 = vlaneseq
        %v1126 = vshrl.u32 %v1125, 7
        %v1127 = vsub.s32 0, %v1126
        %v1128 = vrot.slane %v1123, %v1127
        %v1130 = vadd.f32 %v1107, %v1128
        %v1131 = vadd.f32 %v1108, %v1128
        %v1132 = vadd.f32 %v1109, %v1128
        %v1133 = vadd.f32 %v1110, %v1128
        %v1134 = vadd.f32 %v1111, %v1128
        %v1135 = vadd.f32 %v1112, %v1128
        %v1136 = vadd.f32 %v1113, %v1128
        %v1137 = vadd.f32 %v1114, %v1128
        %v1138 = vadd.f32 %v1115, %v1128
        %v1139 = vadd.f32 %v1116, %v1128
        %v1140 = vadd.f32 %v1117, %v1128
        %v1141 = vadd.f32 %v1118, %v1128
        %v1142 = vadd.f32 %v1119, %v1128
        %v1143 = vadd.f32 %v1120, %v1128
        %v1144 = vadd.f32 %v1121, %v1128
        %v1145 = vadd.f32 %v1122, %v1128
        %s1146 = smul.u32 %s25, 128
        // Predicated region
        $region57: #{tpu_custom_call.1} parent=39 // pred_check
          %p1147 = pneg %p303
        $region58: #{tpu_custom_call.1} parent=39 // pred_check_branch
          %1149 = sbr.rel (%p1147) target = $region60
        $region59: #{tpu_custom_call.1} parent=39 // pred_region
          %s1150 = scalar_lea.vmem [#allocation6], %s1146
          %1151 = vst [vmem:[%s1150] sm:$0xff] %v1130
          %1152 = vst [vmem:[%s1150 + $0x8] sm:$0xff] %v1131
          %1153 = vst [vmem:[%s1150 + $0x10] sm:$0xff] %v1132
          %1154 = vst [vmem:[%s1150 + $0x18] sm:$0xff] %v1133
          %1155 = vst [vmem:[%s1150 + $0x20] sm:$0xff] %v1134
          %1156 = vst [vmem:[%s1150 + $0x28] sm:$0xff] %v1135
          %1157 = vst [vmem:[%s1150 + $0x30] sm:$0xff] %v1136
          %1158 = vst [vmem:[%s1150 + $0x38] sm:$0xff] %v1137
          %1159 = vst [vmem:[%s1150 + $0x40] sm:$0xff] %v1138
          %1160 = vst [vmem:[%s1150 + $0x48] sm:$0xff] %v1139
          %1161 = vst [vmem:[%s1150 + $0x50] sm:$0xff] %v1140
          %1162 = vst [vmem:[%s1150 + $0x58] sm:$0xff] %v1141
          %1163 = vst [vmem:[%s1150 + $0x60] sm:$0xff] %v1142
          %1164 = vst [vmem:[%s1150 + $0x68] sm:$0xff] %v1143
          %1165 = vst [vmem:[%s1150 + $0x70] sm:$0xff] %v1144
          %1166 = vst [vmem:[%s1150 + $0x78] sm:$0xff] %v1145
        $region60: #{tpu_custom_call.1} parent=39 // pred_fallthru
          _
        %p1167 = scmp.ne.s32.totalorder %s24, 2
        // Predicated region
        $region61: #{tpu_custom_call.1} parent=39 // pred_check
          %p1168 = pneg %p1167
        $region62: #{tpu_custom_call.1} parent=39 // pred_check_branch
          %1170 = sbr.rel (%p1168) target = $region64
        $region63: #{tpu_custom_call.1} parent=39 // pred_region
          %v1171 = vmax.f32 %v1130, 0.0
          %v1172 = vmax.f32 %v1131, 0.0
          %v1173 = vmax.f32 %v1132, 0.0
          %v1174 = vmax.f32 %v1133, 0.0
          %v1175 = vmax.f32 %v1134, 0.0
          %v1176 = vmax.f32 %v1135, 0.0
          %v1177 = vmax.f32 %v1136, 0.0
          %v1178 = vmax.f32 %v1137, 0.0
          %v1179 = vmax.f32 %v1138, 0.0
          %v1180 = vmax.f32 %v1139, 0.0
          %v1181 = vmax.f32 %v1140, 0.0
          %v1182 = vmax.f32 %v1141, 0.0
          %v1183 = vmax.f32 %v1142, 0.0
          %v1184 = vmax.f32 %v1143, 0.0
          %v1185 = vmax.f32 %v1144, 0.0
          %v1186 = vmax.f32 %v1145, 0.0
          %s1187 = scalar_lea.vmem [#allocation6], %s1146
          %1188 = vst [vmem:[%s1187] sm:$0xff] %v1171
          %1189 = vst [vmem:[%s1187 + $0x8] sm:$0xff] %v1172
          %1190 = vst [vmem:[%s1187 + $0x10] sm:$0xff] %v1173
          %1191 = vst [vmem:[%s1187 + $0x18] sm:$0xff] %v1174
          %1192 = vst [vmem:[%s1187 + $0x20] sm:$0xff] %v1175
          %1193 = vst [vmem:[%s1187 + $0x28] sm:$0xff] %v1176
          %1194 = vst [vmem:[%s1187 + $0x30] sm:$0xff] %v1177
          %1195 = vst [vmem:[%s1187 + $0x38] sm:$0xff] %v1178
          %1196 = vst [vmem:[%s1187 + $0x40] sm:$0xff] %v1179
          %1197 = vst [vmem:[%s1187 + $0x48] sm:$0xff] %v1180
          %1198 = vst [vmem:[%s1187 + $0x50] sm:$0xff] %v1181
          %1199 = vst [vmem:[%s1187 + $0x58] sm:$0xff] %v1182
          %1200 = vst [vmem:[%s1187 + $0x60] sm:$0xff] %v1183
          %1201 = vst [vmem:[%s1187 + $0x68] sm:$0xff] %v1184
          %1202 = vst [vmem:[%s1187 + $0x70] sm:$0xff] %v1185
          %1203 = vst [vmem:[%s1187 + $0x78] sm:$0xff] %v1186
        $region64: #{tpu_custom_call.1} parent=39 // pred_fallthru
          _
        // Predicated region
        $region65: #{tpu_custom_call.1} parent=39 // pred_check
          %p1204 = pneg %p172
        $region66: #{tpu_custom_call.1} parent=39 // pred_check_branch
          %1206 = sbr.rel (%p1204) target = $region68
        $region67: #{tpu_custom_call.1} parent=39 // pred_region
          %s1208 = ssub.s32 2048, 2048
          %1209 = vsyncadd [#allocation5], %s1208
          %s1210 = sshll.u32 [#allocation6], 4
          %s1211 = int_to_ptr.vmem [resolvable:$true] %s1210
          %1216 = dma.vmem_to_hbm [thread:$0]  %s1211, 2048, %s5, [#allocation5], 128, 128, 8
        $region68: #{tpu_custom_call.1} parent=39 // pred_fallthru
          _
        // Predicated region
        $region69: #{tpu_custom_call.1} parent=39 // pred_check
          %p1217 = pneg %p172
        $region70: #{tpu_custom_call.1} parent=39 // pred_check_branch
          %1219 = sbr.rel (%p1217) target = $region72
        $region71: #{tpu_custom_call.1} parent=39 // pred_region
          %1220 = dma.done [#allocation5], 2048
        $region72: #{tpu_custom_call.1} parent=39 // pred_fallthru
          _
      $region40: #{tpu_custom_call.1} parent=5 // pred_fallthru
        _
      %p1221 = scmp.le.s32.totalorder 2, %s15
      // Predicated region
      $region73: #{tpu_custom_call.1} parent=5 // pred_check
        %p1222 = pneg %p1221
      $region74: #{tpu_custom_call.1} parent=5 // pred_check_branch
        %1224 = sbr.rel (%p1222) target = $region76
      $region75: #{tpu_custom_call.1} parent=5 // pred_region
        %s1225 = ssub.s32 %s15, 2
      $region76: #{tpu_custom_call.1} parent=5 // pred_fallthru
        _
    $region6: #{tpu_custom_call.1} parent=1 // loop_footer
      %s19 = sadd.s32 1, %s15
    $region7: #{tpu_custom_call.1} parent=1 // loop_footer_branch
      %14 = sbr.rel target = $region3
    $region8: #{tpu_custom_call.1} parent=1 // loop_exit
      _
    %1226 = vsyncpa [#allocation4], 1
    %s1227 = scalar_lea.sflag [#allocation4], 1
    %1228 = vsyncpa %s1227, 1
    %1229 = vsyncpa [#allocation5], 1
    %s1230 = scalar_lea.sflag [#allocation5], 1
    %1231 = vsyncpa %s1230, 1

</llo_original>
